<compile_context>
chip_gen: v5e
topology: v5e:2x2
jax: 0.10.0
libtpu: 0.0.40
codegen_flags: <defaults>
</compile_context>

<pallas_src>
import functools

import jax
import jax.numpy as jnp
from jax import lax
from jax.experimental import pallas as pl
from jax.experimental.pallas import tpu as pltpu


def pam_flash_kernel(q_ref, k_ref, v_ref, x_ref, gamma_ref, o_ref,
                     m_sc, l_sc, acc_sc, *, n_valid, block_k, padded):
    """Grid = (batch, query-tile, kv-tile).

    q_ref   : (TQ, Cq)  bf16 query projection tile
    k_ref   : (Cq, TK)  bf16 key projection tile (N-last layout -> no transpose)
    v_ref   : (TK, C)   bf16 value projection tile
    x_ref   : (TQ, C)   f32 residual tile of the input
    gamma   : (1,)      f32 scalar in SMEM
    o_ref   : (TQ, C)   f32 output tile
    m_sc    : (TQ, 1)   running row max
    l_sc    : (TQ, 1)   running row sum
    acc_sc  : (TQ, C)   running output accumulator
    """
    ki = pl.program_id(2)

    @pl.when(ki == 0)
    def _init():
        m_sc[...] = jnp.full_like(m_sc, -jnp.inf)
        l_sc[...] = jnp.zeros_like(l_sc)
        acc_sc[...] = jnp.zeros_like(acc_sc)

    # energy[i, j] = <q_i, k_j>; plain matmul, K already laid out (Cq, TK).
    s = jnp.dot(q_ref[...], k_ref[...], preferred_element_type=jnp.float32)   # (TQ, TK)

    if padded:
        # Mask kv columns that fall into the N-padding region.
        col = ki * block_k + lax.broadcasted_iota(jnp.int32, s.shape, 1)
        s = jnp.where(col < n_valid, s, -jnp.inf)

    # Online (streaming) softmax update.
    m_prev = m_sc[...]
    m_new = jnp.maximum(m_prev, jnp.max(s, axis=-1, keepdims=True))
    alpha = jnp.exp(m_prev - m_new)
    p = jnp.exp(s - m_new)                                                     # (TQ, TK)
    l_sc[...] = alpha * l_sc[...] + jnp.sum(p, axis=-1, keepdims=True)
    acc_sc[...] = alpha * acc_sc[...] + jnp.dot(
        p.astype(jnp.bfloat16), v_ref[...], preferred_element_type=jnp.float32)  # (TQ, C)
    m_sc[...] = m_new

    @pl.when(ki == pl.num_programs(2) - 1)
    def _finalize():
        inv_l = pl.reciprocal(l_sc[...], approx=True)
        out = acc_sc[...] * inv_l                                              # (TQ, C)
        o_ref[...] = (gamma_ref[0] * out + x_ref[...]).astype(o_ref.dtype)


def _round_up(n, m):
    return ((n + m - 1) // m) * m


def _pick_tiles(n):
    """Return (tq, tk, n_pad).  Small N -> one full-extent tile (no padding);
    large N -> 256/512 tiles (lane/sublane aligned) with N padded + masked."""
    if n <= 1024:
        return n, n, n
    tq, tk = 256, 512        # ~3-4 MiB double-buffered at C=512; fits all chips.
    return tq, tk, _round_up(n, tk)   # tk is a multiple of tq


def pam_forward(x_nchw, wq, bq, wk, bk, wv, bv, gamma):
    """x_nchw: (B, C, H, W) float32. Returns (B, C, H, W) float32."""
    B, C, H, W = x_nchw.shape
    N = H * W
    Cq = wq.shape[0]

    # TODO(synk): production callers should supply channels-last activations so
    # these two full-tensor layout transposes around the kernel disappear.
    x_bnc = jnp.transpose(x_nchw.reshape(B, C, N), (0, 2, 1)).astype(jnp.float32)

    # Hoisted 1x1-conv projections: compute once in f32, store/stream as bf16.
    # K is produced directly in (B, Cq, N) layout so the kernel's energy matmul
    # needs no transpose and TK is its lane-dense axis.
    wq32, wk32, wv32 = (w.astype(jnp.float32) for w in (wq, wk, wv))
    q_all = (jnp.einsum('bnc,oc->bno', x_bnc, wq32)
             + bq.astype(jnp.float32)[None, None, :]).astype(jnp.bfloat16)    # (B, N, Cq)
    k_all = (jnp.einsum('bnc,oc->bon', x_bnc, wk32)
             + bk.astype(jnp.float32)[None, :, None]).astype(jnp.bfloat16)    # (B, Cq, N)
    v_all = (jnp.einsum('bnc,oc->bno', x_bnc, wv32)
             + bv.astype(jnp.float32)[None, None, :]).astype(jnp.bfloat16)    # (B, N, C)

    TQ, TK, N_pad = _pick_tiles(N)
    pad = N_pad - N
    if pad:
        q_all = jnp.pad(q_all, ((0, 0), (0, pad), (0, 0)))
        k_all = jnp.pad(k_all, ((0, 0), (0, 0), (0, pad)))
        v_all = jnp.pad(v_all, ((0, 0), (0, pad), (0, 0)))
        x_res = jnp.pad(x_bnc, ((0, 0), (0, pad), (0, 0)))
    else:
        x_res = x_bnc

    g1 = gamma.reshape(1).astype(jnp.float32)

    grid = (B, N_pad // TQ, N_pad // TK)

    kernel = functools.partial(pam_flash_kernel,
                               n_valid=N, block_k=TK, padded=bool(pad))

    out_bnc = pl.pallas_call(
        kernel,
        out_shape=jax.ShapeDtypeStruct((B, N_pad, C), jnp.float32),
        grid=grid,
        in_specs=[
            pl.BlockSpec((None, TQ, Cq), lambda b, qi, ki: (b, qi, 0)),   # Q tiles
            pl.BlockSpec((None, Cq, TK), lambda b, qi, ki: (b, 0, ki)),   # K tiles
            pl.BlockSpec((None, TK, C), lambda b, qi, ki: (b, ki, 0)),    # V tiles
            pl.BlockSpec((None, TQ, C), lambda b, qi, ki: (b, qi, 0)),    # residual x
            pl.BlockSpec(memory_space=pltpu.MemorySpace.SMEM),            # gamma scalar
        ],
        # TODO(synk): for C < 128 an N-last (B, C, N) output layout would give
        # lane-dense stores; kept (B, N, C) so the flash reduction stays on kv.
        out_specs=pl.BlockSpec((None, TQ, C), lambda b, qi, ki: (b, qi, 0)),
        scratch_shapes=[
            pltpu.VMEM((TQ, 1), jnp.float32),    # running max
            pltpu.VMEM((TQ, 1), jnp.float32),    # running sum
            pltpu.VMEM((TQ, C), jnp.float32),    # output accumulator
        ],
        compiler_params=pltpu.CompilerParams(
            dimension_semantics=("parallel", "parallel", "arbitrary"),
            vmem_limit_bytes=32 * 1024 * 1024),
    )(q_all, k_all, v_all, x_res, g1)

    out_bnc = out_bnc[:, :N, :]
    return jnp.transpose(out_bnc, (0, 2, 1)).reshape(B, C, H, W)


def pam_reference(x, wq, bq, wk, bk, wv, bv, gamma):
    """Pure-JAX replica of the PyTorch forward (NCHW, f32) for validation."""
    B, C, H, W = x.shape
    N = H * W

    def conv1x1(x, w, b):  # w: (Co, C), b: (Co,)
        return jnp.einsum('bchw,oc->bohw', x, w) + b[None, :, None, None]

    q = conv1x1(x, wq, bq).reshape(B, -1, N).transpose(0, 2, 1)  # (B, N, Cq)
    k = conv1x1(x, wk, bk).reshape(B, -1, N)                     # (B, Cq, N)
    energy = jnp.einsum('bnc,bcm->bnm', q, k)                    # (B, N, N)
    attn = jax.nn.softmax(energy, axis=-1)
    v = conv1x1(x, wv, bv).reshape(B, -1, N)                     # (B, C, N)
    out = jnp.einsum('bcn,bmn->bcm', v, attn).reshape(B, C, H, W)
    return gamma.reshape(()) * out + x


if __name__ == "__main__":
    key = jax.random.PRNGKey(0)
    kx, kwq, kbq, kwk, kbk, kwv, kbv, kx2 = jax.random.split(key, 8)

    # Case 1: canonical small shape (in_dim=16 -> Cq=2), single-tile kv path.
    B, C, H, W = 2, 16, 8, 8
    Cq = C // 8
    x = jax.random.normal(kx, (B, C, H, W), dtype=jnp.float32)

    # Conv2d(k=1) weights collapse from (Co, Ci, 1, 1) to (Co, Ci).
    wq = jax.random.normal(kwq, (Cq, C), dtype=jnp.float32) * 0.1
    bq = jax.random.normal(kbq, (Cq,), dtype=jnp.float32) * 0.1
    wk = jax.random.normal(kwk, (Cq, C), dtype=jnp.float32) * 0.1
    bk = jax.random.normal(kbk, (Cq,), dtype=jnp.float32) * 0.1
    wv = jax.random.normal(kwv, (C, C), dtype=jnp.float32) * 0.1
    bv = jax.random.normal(kbv, (C,), dtype=jnp.float32) * 0.1
    # Module __init__ sets gamma = 0; use a nonzero value here so the attention
    # path actually contributes to the output under test.
    gamma = jnp.array([0.5], dtype=jnp.float32)

    out = jax.block_until_ready(pam_forward(x, wq, bq, wk, bk, wv, bv, gamma))
    ref = pam_reference(x, wq, bq, wk, bk, wv, bv, gamma)
    assert out.shape == (B, C, H, W)
    # bf16 MXU inputs (f32 accumulation) -> compare with a bf16-level tolerance.
    assert jnp.allclose(out, ref, atol=2e-2, rtol=2e-2), "case 1 mismatch vs reference"

    # Case 2: H = W = 33 -> N = 1089 (non-divisible) exercises the padded /
    # masked multi-tile flash path (TQ=256, TK=512, N padded to 1536).
    B2, H2, W2 = 1, 33, 33
    x2 = jax.random.normal(kx2, (B2, C, H2, W2), dtype=jnp.float32)
    out2 = jax.block_until_ready(pam_forward(x2, wq, bq, wk, bk, wv, bv, gamma))
    ref2 = pam_reference(x2, wq, bq, wk, bk, wv, bv, gamma)
    assert out2.shape == (B2, C, H2, W2)
    assert jnp.allclose(out2, ref2, atol=2e-2, rtol=2e-2), "case 2 mismatch vs reference"

    print("KERNEL_OK")
</pallas_src>

<mosaic_0001>
module attributes {stable_mosaic.version = 11 : i64} {
  func.func @pam_flash_kernel(%arg0: i32, %arg1: i32, %arg2: i32, %arg3: memref<1x64x2xbf16, #tpu.memory_space<vmem>>, %arg4: memref<1x2x64xbf16, #tpu.memory_space<vmem>>, %arg5: memref<1x64x16xbf16, #tpu.memory_space<vmem>>, %arg6: memref<1x64x16xf32, #tpu.memory_space<vmem>>, %arg7: memref<1xf32, #tpu.memory_space<smem>>, %arg8: memref<1x64x16xf32, #tpu.memory_space<vmem>>, %arg9: memref<64x1xf32, #tpu.memory_space<vmem>>, %arg10: memref<64x1xf32, #tpu.memory_space<vmem>>, %arg11: memref<64x16xf32, #tpu.memory_space<vmem>>) attributes {dimension_semantics = [#tpu.dimension_semantics<parallel>, #tpu.dimension_semantics<parallel>, #tpu.dimension_semantics<arbitrary>], iteration_bounds = array<i64: 2, 1, 1>, scalar_prefetch = 0 : i64, scratch_operands = 3 : i64, tpu.core_type = #tpu.core_type<tc>, window_params = [{transform_indices = @transform_0, window_bounds = array<i64: 1, 64, 2>}, {transform_indices = @transform_1, window_bounds = array<i64: 1, 2, 64>}, {transform_indices = @transform_2, window_bounds = array<i64: 1, 64, 16>}, {transform_indices = @transform_3, window_bounds = array<i64: 1, 64, 16>}, {transform_indices = @transform_4, window_bounds = array<i64: 1>}, {transform_indices = @transform_5, window_bounds = array<i64: 1, 64, 16>}]} {
    %c0_i32 = arith.constant 0 : i32
    %0 = arith.cmpi eq, %arg2, %c0_i32 : i32
    %1 = arith.extui %0 : i1 to i32
    %c0_i32_0 = arith.constant 0 : i32
    %2 = arith.cmpi ne, %1, %c0_i32_0 : i32
    scf.if %2 {
      %cst_26 = arith.constant 0xFF800000 : f32
      %36 = vector.broadcast %cst_26 : f32 to vector<64x1xf32>
      %c0_27 = arith.constant 0 : index
      %c0_28 = arith.constant 0 : index
      %37 = vector.load %arg9[%c0_27, %c0_28] : memref<64x1xf32, #tpu.memory_space<vmem>>, vector<64x1xf32>
      tpu.vector_store %arg9[%c0_27, %c0_28], %36 {strides = array<i32>} : memref<64x1xf32, #tpu.memory_space<vmem>>, vector<64x1xf32>,
      %cst_29 = arith.constant 0.000000e+00 : f32
      %38 = vector.broadcast %cst_29 : f32 to vector<64x1xf32>
      %c0_30 = arith.constant 0 : index
      %c0_31 = arith.constant 0 : index
      %39 = vector.load %arg10[%c0_30, %c0_31] : memref<64x1xf32, #tpu.memory_space<vmem>>, vector<64x1xf32>
      tpu.vector_store %arg10[%c0_30, %c0_31], %38 {strides = array<i32>} : memref<64x1xf32, #tpu.memory_space<vmem>>, vector<64x1xf32>,
      %cst_32 = arith.constant 0.000000e+00 : f32
      %40 = vector.broadcast %cst_32 : f32 to vector<64x16xf32>
      %c0_33 = arith.constant 0 : index
      %c0_34 = arith.constant 0 : index
      %41 = vector.load %arg11[%c0_33, %c0_34] : memref<64x16xf32, #tpu.memory_space<vmem>>, vector<64x16xf32>
      tpu.vector_store %arg11[%c0_33, %c0_34], %40 {strides = array<i32>} : memref<64x16xf32, #tpu.memory_space<vmem>>, vector<64x16xf32>,
    } else {
    }
    %c0 = arith.constant 0 : index
    %c0_1 = arith.constant 0 : index
    %c0_2 = arith.constant 0 : index
    %3 = vector.load %arg3[%c0, %c0_1, %c0_2] : memref<1x64x2xbf16, #tpu.memory_space<vmem>>, vector<1x64x2xbf16>
    %4 = vector.shape_cast %3 : vector<1x64x2xbf16> to vector<64x2xbf16>
    %c0_3 = arith.constant 0 : index
    %c0_4 = arith.constant 0 : index
    %c0_5 = arith.constant 0 : index
    %5 = vector.load %arg4[%c0_3, %c0_4, %c0_5] : memref<1x2x64xbf16, #tpu.memory_space<vmem>>, vector<1x2x64xbf16>
    %6 = vector.shape_cast %5 : vector<1x2x64xbf16> to vector<2x64xbf16>
    %cst = arith.constant dense<0.000000e+00> : vector<64x64xf32>
    %7 = tpu.matmul %4, %6, %cst {dimension_numbers = #tpu.dot_dimension_numbers<[1], [0], [0], [1], [0, 0, 1, 1], [], []>} : vector<64x2xbf16>, vector<2x64xbf16>, vector<64x64xf32> -> vector<64x64xf32>
    %c0_6 = arith.constant 0 : index
    %c0_7 = arith.constant 0 : index
    %8 = vector.load %arg9[%c0_6, %c0_7] : memref<64x1xf32, #tpu.memory_space<vmem>>, vector<64x1xf32>
    %cst_8 = arith.constant dense<0xFF800000> : vector<64xf32>
    %9 = vector.multi_reduction <maximumf>, %7, %cst_8 [1] : vector<64x64xf32> to vector<64xf32>
    %10 = vector.shape_cast %9 : vector<64xf32> to vector<64x1xf32>
    %11 = arith.maximumf %8, %10 : vector<64x1xf32>
    %12 = arith.subf %8, %11 : vector<64x1xf32>
    %13 = math.exp %12 : vector<64x1xf32>
    %14 = vector.broadcast %11 : vector<64x1xf32> to vector<64x64xf32>
    %15 = arith.subf %7, %14 : vector<64x64xf32>
    %16 = math.exp %15 : vector<64x64xf32>
    %c0_9 = arith.constant 0 : index
    %c0_10 = arith.constant 0 : index
    %17 = vector.load %arg10[%c0_9, %c0_10] : memref<64x1xf32, #tpu.memory_space<vmem>>, vector<64x1xf32>
    %18 = arith.mulf %13, %17 : vector<64x1xf32>
    %cst_11 = arith.constant dense<0.000000e+00> : vector<64xf32>
    %19 = vector.multi_reduction <add>, %16, %cst_11 [1] : vector<64x64xf32> to vector<64xf32>
    %20 = vector.shape_cast %19 : vector<64xf32> to vector<64x1xf32>
    %21 = arith.addf %18, %20 : vector<64x1xf32>
    %c0_12 = arith.constant 0 : index
    %c0_13 = arith.constant 0 : index
    %22 = vector.load %arg10[%c0_12, %c0_13] : memref<64x1xf32, #tpu.memory_space<vmem>>, vector<64x1xf32>
    tpu.vector_store %arg10[%c0_12, %c0_13], %21 {strides = array<i32>} : memref<64x1xf32, #tpu.memory_space<vmem>>, vector<64x1xf32>,
    %c0_14 = arith.constant 0 : index
    %c0_15 = arith.constant 0 : index
    %23 = vector.load %arg11[%c0_14, %c0_15] : memref<64x16xf32, #tpu.memory_space<vmem>>, vector<64x16xf32>
    %24 = vector.broadcast %13 : vector<64x1xf32> to vector<64x16xf32>
    %25 = arith.mulf %24, %23 : vector<64x16xf32>
    %26 = arith.truncf %16 : vector<64x64xf32> to vector<64x64xbf16>
    %c0_16 = arith.constant 0 : index
    %c0_17 = arith.constant 0 : index
    %c0_18 = arith.constant 0 : index
    %27 = vector.load %arg5[%c0_16, %c0_17, %c0_18] : memref<1x64x16xbf16, #tpu.memory_space<vmem>>, vector<1x64x16xbf16>
    %28 = vector.shape_cast %27 : vector<1x64x16xbf16> to vector<64x16xbf16>
    %cst_19 = arith.constant dense<0.000000e+00> : vector<64x16xf32>
    %29 = tpu.matmul %26, %28, %cst_19 {dimension_numbers = #tpu.dot_dimension_numbers<[1], [0], [0], [1], [0, 0, 1, 1], [], []>} : vector<64x64xbf16>, vector<64x16xbf16>, vector<64x16xf32> -> vector<64x16xf32>
    %30 = arith.addf %25, %29 : vector<64x16xf32>
    %c0_20 = arith.constant 0 : index
    %c0_21 = arith.constant 0 : index
    %31 = vector.load %arg11[%c0_20, %c0_21] : memref<64x16xf32, #tpu.memory_space<vmem>>, vector<64x16xf32>
    tpu.vector_store %arg11[%c0_20, %c0_21], %30 {strides = array<i32>} : memref<64x16xf32, #tpu.memory_space<vmem>>, vector<64x16xf32>,
    %c0_22 = arith.constant 0 : index
    %c0_23 = arith.constant 0 : index
    %32 = vector.load %arg9[%c0_22, %c0_23] : memref<64x1xf32, #tpu.memory_space<vmem>>, vector<64x1xf32>
    tpu.vector_store %arg9[%c0_22, %c0_23], %11 {strides = array<i32>} : memref<64x1xf32, #tpu.memory_space<vmem>>, vector<64x1xf32>,
    %c0_i32_24 = arith.constant 0 : i32
    %33 = arith.cmpi eq, %arg2, %c0_i32_24 : i32
    %34 = arith.extui %33 : i1 to i32
    %c0_i32_25 = arith.constant 0 : i32
    %35 = arith.cmpi ne, %34, %c0_i32_25 : i32
    scf.if %35 {
      %c0_26 = arith.constant 0 : index
      %c0_27 = arith.constant 0 : index
      %36 = vector.load %arg10[%c0_26, %c0_27] : memref<64x1xf32, #tpu.memory_space<vmem>>, vector<64x1xf32>
      %37 = tpu.reciprocal %36 {approx = true} : vector<64x1xf32> -> vector<64x1xf32>
      %c0_28 = arith.constant 0 : index
      %c0_29 = arith.constant 0 : index
      %38 = vector.load %arg11[%c0_28, %c0_29] : memref<64x16xf32, #tpu.memory_space<vmem>>, vector<64x16xf32>
      %39 = vector.broadcast %37 : vector<64x1xf32> to vector<64x16xf32>
      %40 = arith.mulf %38, %39 : vector<64x16xf32>
      %c0_30 = arith.constant 0 : index
      %41 = memref.load %arg7[%c0_30] : memref<1xf32, #tpu.memory_space<smem>>
      %42 = vector.broadcast %41 : f32 to vector<64x16xf32>
      %43 = arith.mulf %42, %40 : vector<64x16xf32>
      %c0_31 = arith.constant 0 : index
      %c0_32 = arith.constant 0 : index
      %c0_33 = arith.constant 0 : index
      %44 = vector.load %arg6[%c0_31, %c0_32, %c0_33] : memref<1x64x16xf32, #tpu.memory_space<vmem>>, vector<1x64x16xf32>
      %45 = vector.shape_cast %44 : vector<1x64x16xf32> to vector<64x16xf32>
      %46 = arith.addf %43, %45 : vector<64x16xf32>
      %c0_34 = arith.constant 0 : index
      %c0_35 = arith.constant 0 : index
      %c0_36 = arith.constant 0 : index
      %47 = vector.load %arg8[%c0_34, %c0_35, %c0_36] : memref<1x64x16xf32, #tpu.memory_space<vmem>>, vector<1x64x16xf32>
      %48 = vector.shape_cast %47 : vector<1x64x16xf32> to vector<64x16xf32>
      %49 = vector.shape_cast %46 : vector<64x16xf32> to vector<1x64x16xf32>
      tpu.vector_store %arg8[%c0_34, %c0_35, %c0_36], %49 {strides = array<i32>} : memref<1x64x16xf32, #tpu.memory_space<vmem>>, vector<1x64x16xf32>,
    } else {
    }
    return
  }
  func.func @transform_0(%arg0: i32, %arg1: i32, %arg2: i32) -> (i32, i32, i32) {
    %c0_i32 = arith.constant 0 : i32
    %c0_i32_0 = arith.constant 0 : i32
    return %arg0, %arg1, %c0_i32 : i32, i32, i32
  }
  func.func @transform_1(%arg0: i32, %arg1: i32, %arg2: i32) -> (i32, i32, i32) {
    %c0_i32 = arith.constant 0 : i32
    %c0_i32_0 = arith.constant 0 : i32
    return %arg0, %c0_i32, %arg2 : i32, i32, i32
  }
  func.func @transform_2(%arg0: i32, %arg1: i32, %arg2: i32) -> (i32, i32, i32) {
    %c0_i32 = arith.constant 0 : i32
    %c0_i32_0 = arith.constant 0 : i32
    return %arg0, %arg2, %c0_i32 : i32, i32, i32
  }
  func.func @transform_3(%arg0: i32, %arg1: i32, %arg2: i32) -> (i32, i32, i32) {
    %c0_i32 = arith.constant 0 : i32
    %c0_i32_0 = arith.constant 0 : i32
    return %arg0, %arg1, %c0_i32 : i32, i32, i32
  }
  func.func @transform_4(%arg0: i32, %arg1: i32, %arg2: i32) -> i32 {
    %c0_i32 = arith.constant 0 : i32
    %c0_i32_0 = arith.constant 0 : i32
    return %c0_i32 : i32
  }
  func.func @transform_5(%arg0: i32, %arg1: i32, %arg2: i32) -> (i32, i32, i32) {
    %c0_i32 = arith.constant 0 : i32
    %c0_i32_0 = arith.constant 0 : i32
    return %arg0, %arg1, %c0_i32 : i32, i32, i32
  }
}

</mosaic_0001>

<llo_original>
// kernel: tpu_custom_call.1
$region0: #{tpu_custom_call.1}
  #allocation0 [shape = 'u32[]', space=smem, size = 0x4, offset = 0x4, fixed_abs, tag = 'smem constant byte address 0x4 - core index']
  #allocation1 [shape = 'u32[72,128]{1,0:T(1,128)}', space=vmem, size = 0x9000, scoped, tag = 'internal scratch']
  #allocation2 [shape = 'f32[64,1]{1,0:T(8,128)}', space=vmem, size = 0x8000, scoped, tag = 'scratch operand']
  #allocation3 [shape = 'f32[64,1]{1,0:T(8,128)}', space=vmem, size = 0x8000, scoped, tag = 'scratch operand']
  #allocation4 [shape = 'f32[64,16]{1,0:T(8,128)}', space=vmem, size = 0x8000, scoped, tag = 'scratch operand']
  #allocation5 [shape = 'f32[1]{0:T(128)S(6)}', space=smem, size = 0x200, scoped, tag = 'scoped memory for tpu_custom_call.1']
  %s0 = inlined_call_operand.vmem [shape: bf16[2,64,2], index: 0, kind: input, shape index: {}]
  %s1 = inlined_call_operand.vmem [shape: bf16[2,2,64], index: 1, kind: input, shape index: {}]
  %s2 = inlined_call_operand.vmem [shape: bf16[2,64,16], index: 2, kind: input, shape index: {}]
  %s3 = inlined_call_operand.vmem [shape: f32[2,64,16], index: 3, kind: input, shape index: {}]
  %s4 = inlined_call_operand.<no memory space> [shape: f32[1], index: 4, kind: input, shape index: {}]
  %s5 = inlined_call_operand.vmem [shape: f32[2,64,16], index: 5, kind: output, shape index: {}]
  %s6 = sld [smem:[#allocation0]]
  $region61: #{tpu_custom_call.1} parent=0
    _
  %s8 = ssub.s32 1, %s6
  %s9 = scalar_select 0, %s8, %s6
  %10 = sst [smem:[#allocation5]] %s4
  loop: start=0, step=1, limit=4
  $region2: #{tpu_custom_call.1} parent=0 // loop_pre_header
    _
  $region3: #{tpu_custom_call.1} parent=0 // loop_header
    %s12 = sphi 0, %s16
    %p13 = scmp.ge.s32.totalorder %s12, 4
    %s19 = sphi 0, %s38
    %s20 = sphi 0, %s34
    %s21 = sphi 0, %s30
    %s22 = sphi 0, %s19
    %s23 = sphi 0, %s20
    %s24 = sphi 0, %s21
    %s25 = sphi 0, %s22
    %s26 = sphi 0, %s23
    %s27 = sphi 0, %s24
    %s43 = sphi 0, %s45
    %s46 = sphi 0, %s43
    %s47 = sphi 0, %s46
    %s63 = sphi 0, %s47
    %s71 = sphi 0, %s73
    %s74 = sphi 0, %s71
    %s75 = sphi 0, %s74
    %s91 = sphi 0, %s75
    %s99 = sphi 0, %s101
    %s102 = sphi 0, %s99
    %s103 = sphi 0, %s102
    %s119 = sphi 0, %s103
    %s127 = sphi 0, %s129
    %s130 = sphi 0, %s127
    %s131 = sphi 0, %s130
    %s147 = sphi 0, %s131
    %s151 = sphi 0, %s151
    %s153 = sphi 0, %s151
    %s154 = sphi 0, %s153
    %s168 = sphi 0, %s154
    %s176 = sphi 0, %s178
    %s179 = sphi 0, %s176
    %s180 = sphi 0, %s179
    %s196 = sphi 0, %s180
  $region4: #{tpu_custom_call.1} parent=0 // loop_header_branch
    %15 = sbr.rel (%p13) target = $region8
  $region5: #{tpu_custom_call.1} parent=0 // loop_body
    %s17 = ssub.s32 %s12, 1
    %s18 = ssub.s32 %s12, 2
    %s28 = sadd.s32 1, %s21
    %p29 = scmp.ge.s32.totalorder %s28, 1
    %s30 = scalar_select %p29, 0, %s28
    %s31 = sadd.s32 1, %s20
    %s32 = scalar_select %p29, %s31, %s20
    %p33 = scmp.ge.s32.totalorder %s32, 1
    %s34 = scalar_select %p33, 0, %s32
    %s35 = sadd.s32 1, %s19
    %s36 = scalar_select %p33, %s35, %s19
    %p37 = scmp.ge.s32.totalorder %s36, 2
    %s38 = scalar_select %p37, 0, %s36
    %s39 = ssub.s32 %s19, %s38
    %s40 = ssub.s32 %s20, %s34
    %s41 = sor.u32 %s39, %s40
    %p42 = scmp.eq.s32.totalorder %s41, 0
    %s44 = sadd.s32 %s43, 1
    %s45 = scalar_select %p42, %s43, %s44
    %p48 = pneg %p42
    %p49 = scmp.eq.s32.totalorder %s12, 1
    %p50 = por %p48, %p49
    %p51 = scmp.ne.s32.totalorder %s43, %s46
    %p52 = scmp.eq.s32.totalorder %s12, 0
    %p53 = por %p51, %p52
    %p54 = scmp.ne.s32.totalorder %s43, %s46
    %p55 = scmp.eq.s32.totalorder %s17, 1
    %p56 = por %p54, %p55
    %p57 = scmp.ne.s32.totalorder %s46, %s47
    %p58 = scmp.eq.s32.totalorder %s17, 0
    %p59 = por %p57, %p58
    %p60 = scmp.ne.s32.totalorder %s46, %s47
    %p61 = scmp.eq.s32.totalorder %s18, 1
    %p62 = por %p60, %p61
    %p64 = scmp.ne.s32.totalorder %s47, %s63
    %p65 = scmp.eq.s32.totalorder %s18, 0
    %p66 = por %p64, %p65
    %s67 = ssub.s32 %s19, %s38
    %s68 = ssub.s32 %s21, %s30
    %s69 = sor.u32 %s67, %s68
    %p70 = scmp.eq.s32.totalorder %s69, 0
    %s72 = sadd.s32 %s71, 1
    %s73 = scalar_select %p70, %s71, %s72
    %p76 = pneg %p70
    %p77 = scmp.eq.s32.totalorder %s12, 1
    %p78 = por %p76, %p77
    %p79 = scmp.ne.s32.totalorder %s71, %s74
    %p80 = scmp.eq.s32.totalorder %s12, 0
    %p81 = por %p79, %p80
    %p82 = scmp.ne.s32.totalorder %s71, %s74
    %p83 = scmp.eq.s32.totalorder %s17, 1
    %p84 = por %p82, %p83
    %p85 = scmp.ne.s32.totalorder %s74, %s75
    %p86 = scmp.eq.s32.totalorder %s17, 0
    %p87 = por %p85, %p86
    %p88 = scmp.ne.s32.totalorder %s74, %s75
    %p89 = scmp.eq.s32.totalorder %s18, 1
    %p90 = por %p88, %p89
    %p92 = scmp.ne.s32.totalorder %s75, %s91
    %p93 = scmp.eq.s32.totalorder %s18, 0
    %p94 = por %p92, %p93
    %s95 = ssub.s32 %s19, %s38
    %s96 = ssub.s32 %s21, %s30
    %s97 = sor.u32 %s95, %s96
    %p98 = scmp.eq.s32.totalorder %s97, 0
    %s100 = sadd.s32 %s99, 1
    %s101 = scalar_select %p98, %s99, %s100
    %p104 = pneg %p98
    %p105 = scmp.eq.s32.totalorder %s12, 1
    %p106 = por %p104, %p105
    %p107 = scmp.ne.s32.totalorder %s99, %s102
    %p108 = scmp.eq.s32.totalorder %s12, 0
    %p109 = por %p107, %p108
    %p110 = scmp.ne.s32.totalorder %s99, %s102
    %p111 = scmp.eq.s32.totalorder %s17, 1
    %p112 = por %p110, %p111
    %p113 = scmp.ne.s32.totalorder %s102, %s103
    %p114 = scmp.eq.s32.totalorder %s17, 0
    %p115 = por %p113, %p114
    %p116 = scmp.ne.s32.totalorder %s102, %s103
    %p117 = scmp.eq.s32.totalorder %s18, 1
    %p118 = por %p116, %p117
    %p120 = scmp.ne.s32.totalorder %s103, %s119
    %p121 = scmp.eq.s32.totalorder %s18, 0
    %p122 = por %p120, %p121
    %s123 = ssub.s32 %s19, %s38
    %s124 = ssub.s32 %s20, %s34
    %s125 = sor.u32 %s123, %s124
    %p126 = scmp.eq.s32.totalorder %s125, 0
    %s128 = sadd.s32 %s127, 1
    %s129 = scalar_select %p126, %s127, %s128
    %p132 = pneg %p126
    %p133 = scmp.eq.s32.totalorder %s12, 1
    %p134 = por %p132, %p133
    %p135 = scmp.ne.s32.totalorder %s127, %s130
    %p136 = scmp.eq.s32.totalorder %s12, 0
    %p137 = por %p135, %p136
    %p138 = scmp.ne.s32.totalorder %s127, %s130
    %p139 = scmp.eq.s32.totalorder %s17, 1
    %p140 = por %p138, %p139
    %p141 = scmp.ne.s32.totalorder %s130, %s131
    %p142 = scmp.eq.s32.totalorder %s17, 0
    %p143 = por %p141, %p142
    %p144 = scmp.ne.s32.totalorder %s130, %s131
    %p145 = scmp.eq.s32.totalorder %s18, 1
    %p146 = por %p144, %p145
    %p148 = scmp.ne.s32.totalorder %s131, %s147
    %p149 = scmp.eq.s32.totalorder %s18, 0
    %p150 = por %p148, %p149
    %s152 = sadd.s32 %s151, 1
    %p155 = scmp.eq.s32.totalorder %s12, 1
    %p156 = scmp.ne.s32.totalorder %s151, %s153
    %p157 = scmp.eq.s32.totalorder %s12, 0
    %p158 = por %p156, %p157
    %p159 = scmp.ne.s32.totalorder %s151, %s153
    %p160 = scmp.eq.s32.totalorder %s17, 1
    %p161 = por %p159, %p160
    %p162 = scmp.ne.s32.totalorder %s153, %s154
    %p163 = scmp.eq.s32.totalorder %s17, 0
    %p164 = por %p162, %p163
    %p165 = scmp.ne.s32.totalorder %s153, %s154
    %p166 = scmp.eq.s32.totalorder %s18, 1
    %p167 = por %p165, %p166
    %p169 = scmp.ne.s32.totalorder %s154, %s168
    %p170 = scmp.eq.s32.totalorder %s18, 0
    %p171 = por %p169, %p170
    %s172 = ssub.s32 %s19, %s38
    %s173 = ssub.s32 %s20, %s34
    %s174 = sor.u32 %s172, %s173
    %p175 = scmp.eq.s32.totalorder %s174, 0
    %s177 = sadd.s32 %s176, 1
    %s178 = scalar_select %p175, %s176, %s177
    %p181 = pneg %p175
    %p182 = scmp.eq.s32.totalorder %s12, 1
    %p183 = por %p181, %p182
    %p184 = scmp.ne.s32.totalorder %s176, %s179
    %p185 = scmp.eq.s32.totalorder %s12, 0
    %p186 = por %p184, %p185
    %p187 = scmp.ne.s32.totalorder %s176, %s179
    %p188 = scmp.eq.s32.totalorder %s17, 1
    %p189 = por %p187, %p188
    %p190 = scmp.ne.s32.totalorder %s179, %s180
    %p191 = scmp.eq.s32.totalorder %s17, 0
    %p192 = por %p190, %p191
    %p193 = scmp.ne.s32.totalorder %s179, %s180
    %p194 = scmp.eq.s32.totalorder %s18, 1
    %p195 = por %p193, %p194
    %p197 = scmp.ne.s32.totalorder %s180, %s196
    %p198 = scmp.eq.s32.totalorder %s18, 0
    %p199 = por %p197, %p198
    %p200 = scmp.le.s32.totalorder 1, %s12
    %p201 = scmp.lt.s32.totalorder %s12, 3
    %p202 = pnand %p200, %p201
    %p203 = pneg %p202
    // Predicated region
    $region9: #{tpu_custom_call.1} parent=5 // pred_check
      _
    $region10: #{tpu_custom_call.1} parent=5 // pred_check_branch
      %205 = sbr.rel (%p202) target = $region12
    $region11: #{tpu_custom_call.1} parent=5 // pred_region
      %s206 = ssub.s32 %s12, 1
      // Predicated region
      $region13: #{tpu_custom_call.1} parent=11 // pred_check
        %p207 = pneg %p164
      $region14: #{tpu_custom_call.1} parent=11 // pred_check_branch
        %209 = sbr.rel (%p207) target = $region16
      $region15: #{tpu_custom_call.1} parent=11 // pred_region
        _
      $region16: #{tpu_custom_call.1} parent=11 // pred_fallthru
        _
    $region12: #{tpu_custom_call.1} parent=5 // pred_fallthru
      _
    %p210 = scmp.lt.s32.totalorder %s12, 2
    // Predicated region
    $region17: #{tpu_custom_call.1} parent=5 // pred_check
      %p211 = pneg %p210
    $region18: #{tpu_custom_call.1} parent=5 // pred_check_branch
      %213 = sbr.rel (%p211) target = $region20
    $region19: #{tpu_custom_call.1} parent=5 // pred_region
      // Predicated region
      $region21: #{tpu_custom_call.1} parent=19 // pred_check
        %p214 = pneg %p53
      $region22: #{tpu_custom_call.1} parent=19 // pred_check_branch
        %216 = sbr.rel (%p214) target = $region24
      $region23: #{tpu_custom_call.1} parent=19 // pred_region
        %s217 = smul.u32 8, %s20
        %p218 = scmp.lt.s32.totalorder %s19, 1
        %s219 = scalar_select %p218, %s19, 1
        %p220 = scmp.lt.s32.totalorder %s217, 7
        %s221 = scalar_select %p220, %s217, 7
        %s222 = smul.addr %s219, 8
        %s223 = sadd.s32 %s221, %s222
        %s224 = smul.addr %s223, 4
        %s225 = scalar_lea.vmem %s0, %s224
        %s226 = smul.u32 8, %s20
      $region24: #{tpu_custom_call.1} parent=19 // pred_fallthru
        _
      // Predicated region
      $region25: #{tpu_custom_call.1} parent=19 // pred_check
        %p227 = pneg %p81
      $region26: #{tpu_custom_call.1} parent=19 // pred_check_branch
        %229 = sbr.rel (%p227) target = $region28
      $region27: #{tpu_custom_call.1} parent=19 // pred_region
        %p230 = scmp.lt.s32.totalorder %s19, 1
        %s231 = scalar_select %p230, %s19, 1
        %p232 = scmp.lt.s32.totalorder %s21, 0
        %s233 = scalar_select %p232, %s21, 0
        %s234 = sadd.s32 %s233, %s231
        %s235 = scalar_lea.vmem %s1, %s234
      $region28: #{tpu_custom_call.1} parent=19 // pred_fallthru
        _
      // Predicated region
      $region29: #{tpu_custom_call.1} parent=19 // pred_check
        %p236 = pneg %p109
      $region30: #{tpu_custom_call.1} parent=19 // pred_check_branch
        %238 = sbr.rel (%p236) target = $region32
      $region31: #{tpu_custom_call.1} parent=19 // pred_region
        %s239 = smul.u32 8, %s21
        %p240 = scmp.lt.s32.totalorder %s19, 1
        %s241 = scalar_select %p240, %s19, 1
        %p242 = scmp.lt.s32.totalorder %s239, 7
        %s243 = scalar_select %p242, %s239, 7
        %s244 = smul.addr %s241, 8
        %s245 = sadd.s32 %s243, %s244
        %s246 = smul.addr %s245, 4
        %s247 = scalar_lea.vmem %s2, %s246
        %s248 = smul.u32 8, %s21
      $region32: #{tpu_custom_call.1} parent=19 // pred_fallthru
        _
      // Predicated region
      $region33: #{tpu_custom_call.1} parent=19 // pred_check
        %p249 = pneg %p137
      $region34: #{tpu_custom_call.1} parent=19 // pred_check_branch
        %251 = sbr.rel (%p249) target = $region36
      $region35: #{tpu_custom_call.1} parent=19 // pred_region
        %s252 = smul.u32 8, %s20
        %p253 = scmp.lt.s32.totalorder %s19, 1
        %s254 = scalar_select %p253, %s19, 1
        %p255 = scmp.lt.s32.totalorder %s252, 7
        %s256 = scalar_select %p255, %s252, 7
        %s257 = smul.addr %s254, 8
        %s258 = sadd.s32 %s256, %s257
        %s259 = smul.addr %s258, 8
        %s260 = scalar_lea.vmem %s3, %s259
        %s261 = smul.u32 8, %s20
      $region36: #{tpu_custom_call.1} parent=19 // pred_fallthru
        _
    $region20: #{tpu_custom_call.1} parent=5 // pred_fallthru
      _
    %p262 = scmp.le.s32.totalorder 1, %s12
    %p263 = scmp.lt.s32.totalorder %s12, 3
    %p264 = pnand %p262, %p263
    %p265 = pneg %p264
    // Predicated region
    $region37: #{tpu_custom_call.1} parent=5 // pred_check
      _
    $region38: #{tpu_custom_call.1} parent=5 // pred_check_branch
      %267 = sbr.rel (%p264) target = $region40
    $region39: #{tpu_custom_call.1} parent=5 // pred_region
      %s268 = ssub.s32 %s12, 1
      %s269 = smul.u32 8, %s23
      %p270 = scmp.lt.s32.totalorder %s22, 1
      %s271 = scalar_select %p270, %s22, 1
      %p272 = scmp.lt.s32.totalorder %s269, 7
      %s273 = scalar_select %p272, %s269, 7
      %s274 = smul.addr %s271, 8
      %s275 = sadd.s32 %s273, %s274
      %s276 = smul.addr %s275, 4
      %s277 = scalar_lea.vmem %s0, %s276
      %p278 = pneg %p59
      %p279 = pneg %p56
      %p280 = scmp.lt.s32.totalorder %s22, 1
      %s281 = scalar_select %p280, %s22, 1
      %p282 = scmp.lt.s32.totalorder %s24, 0
      %s283 = scalar_select %p282, %s24, 0
      %s284 = sadd.s32 %s283, %s281
      %s285 = scalar_lea.vmem %s1, %s284
      %p286 = pneg %p87
      %p287 = pneg %p84
      %s288 = smul.u32 8, %s24
      %p289 = scmp.lt.s32.totalorder %s22, 1
      %s290 = scalar_select %p289, %s22, 1
      %p291 = scmp.lt.s32.totalorder %s288, 7
      %s292 = scalar_select %p291, %s288, 7
      %s293 = smul.addr %s290, 8
      %s294 = sadd.s32 %s292, %s293
      %s295 = smul.addr %s294, 4
      %s296 = scalar_lea.vmem %s2, %s295
      %p297 = pneg %p115
      %p298 = pneg %p112
      %s299 = smul.u32 8, %s23
      %p300 = scmp.lt.s32.totalorder %s22, 1
      %s301 = scalar_select %p300, %s22, 1
      %p302 = scmp.lt.s32.totalorder %s299, 7
      %s303 = scalar_select %p302, %s299, 7
      %s304 = smul.addr %s301, 8
      %s305 = sadd.s32 %s303, %s304
      %s306 = smul.addr %s305, 8
      %s307 = scalar_lea.vmem %s3, %s306
      %p308 = pneg %p143
      %p309 = pneg %p140
      %p310 = pneg %p164
      %p311 = pneg %p161
      %p312 = pneg %p192
      %p313 = pneg %p189
      %s314 = smul.u32 8, %s23
      %p315 = scmp.lt.s32.totalorder %s22, 1
      %s316 = scalar_select %p315, %s22, 1
      %p317 = scmp.lt.s32.totalorder %s314, 7
      %s318 = scalar_select %p317, %s314, 7
      %s319 = smul.addr %s316, 8
      %s320 = sadd.s32 %s318, %s319
      %s321 = smul.addr %s320, 8
      %s322 = scalar_lea.vmem %s5, %s321
      %s323 = smul.u32 8, %s23
      %p324 = scmp.lt.s32.totalorder %s22, 1
      %s325 = scalar_select %p324, %s22, 1
      %p326 = scmp.lt.s32.totalorder %s323, 7
      %s327 = scalar_select %p326, %s323, 7
      %s328 = smul.addr %s325, 8
      %s329 = sadd.s32 %s327, %s328
      %s330 = smul.addr %s329, 4
      %s331 = scalar_lea.vmem %s0, %s330
      %s332 = smul.u32 8, %s23
      %p333 = scmp.lt.s32.totalorder %s22, 1
      %s334 = scalar_select %p333, %s22, 1
      %p335 = scmp.lt.s32.totalorder %s24, 0
      %s336 = scalar_select %p335, %s24, 0
      %s337 = sadd.s32 %s336, %s334
      %s338 = scalar_lea.vmem %s1, %s337
      %s339 = smul.u32 8, %s24
      %p340 = scmp.lt.s32.totalorder %s22, 1
      %s341 = scalar_select %p340, %s22, 1
      %p342 = scmp.lt.s32.totalorder %s339, 7
      %s343 = scalar_select %p342, %s339, 7
      %s344 = smul.addr %s341, 8
      %s345 = sadd.s32 %s343, %s344
      %s346 = smul.addr %s345, 4
      %s347 = scalar_lea.vmem %s2, %s346
      %s348 = smul.u32 8, %s24
      %s349 = smul.u32 8, %s23
      %p350 = scmp.lt.s32.totalorder %s22, 1
      %s351 = scalar_select %p350, %s22, 1
      %p352 = scmp.lt.s32.totalorder %s349, 7
      %s353 = scalar_select %p352, %s349, 7
      %s354 = smul.addr %s351, 8
      %s355 = sadd.s32 %s353, %s354
      %s356 = smul.addr %s355, 8
      %s357 = scalar_lea.vmem %s3, %s356
      %s358 = smul.u32 8, %s23
      %s359 = smul.u32 8, %s23
      %p360 = scmp.lt.s32.totalorder %s22, 1
      %s361 = scalar_select %p360, %s22, 1
      %p362 = scmp.lt.s32.totalorder %s359, 7
      %s363 = scalar_select %p362, %s359, 7
      %s364 = smul.addr %s361, 8
      %s365 = sadd.s32 %s363, %s364
      %s366 = smul.addr %s365, 8
      %s367 = scalar_lea.vmem %s5, %s366
      %s368 = smul.u32 8, %s23
      %p370 = scmp.eq.s32.totalorder %s24, 0
      // Predicated region
      $region41: #{tpu_custom_call.1} parent=39 // pred_check
        %p371 = pneg %p370
      $region42: #{tpu_custom_call.1} parent=39 // pred_check_branch
        %373 = sbr.rel (%p371) target = $region44
      $region43: #{tpu_custom_call.1} parent=39 // pred_region
        %vm374 = vcmask 7168
        %375 = vst.msk [vmem:[#allocation2] sm:$0xff] %vm374, -inf
        %376 = vst.msk [vmem:[#allocation2 + $0x8] sm:$0xff] %vm374, -inf
        %377 = vst.msk [vmem:[#allocation2 + $0x10] sm:$0xff] %vm374, -inf
        %378 = vst.msk [vmem:[#allocation2 + $0x18] sm:$0xff] %vm374, -inf
        %379 = vst.msk [vmem:[#allocation2 + $0x20] sm:$0xff] %vm374, -inf
        %380 = vst.msk [vmem:[#allocation2 + $0x28] sm:$0xff] %vm374, -inf
        %381 = vst.msk [vmem:[#allocation2 + $0x30] sm:$0xff] %vm374, -inf
        %382 = vst.msk [vmem:[#allocation2 + $0x38] sm:$0xff] %vm374, -inf
        %383 = vst.msk [vmem:[#allocation3] sm:$0xff] %vm374, 0.0
        %384 = vst.msk [vmem:[#allocation3 + $0x8] sm:$0xff] %vm374, 0.0
        %385 = vst.msk [vmem:[#allocation3 + $0x10] sm:$0xff] %vm374, 0.0
        %386 = vst.msk [vmem:[#allocation3 + $0x18] sm:$0xff] %vm374, 0.0
        %387 = vst.msk [vmem:[#allocation3 + $0x20] sm:$0xff] %vm374, 0.0
        %388 = vst.msk [vmem:[#allocation3 + $0x28] sm:$0xff] %vm374, 0.0
        %389 = vst.msk [vmem:[#allocation3 + $0x30] sm:$0xff] %vm374, 0.0
        %390 = vst.msk [vmem:[#allocation3 + $0x38] sm:$0xff] %vm374, 0.0
        %vm391 = vcmask 130048
        %392 = vst.msk [vmem:[#allocation4] sm:$0xff] %vm391, 0.0
        %393 = vst.msk [vmem:[#allocation4 + $0x8] sm:$0xff] %vm391, 0.0
        %394 = vst.msk [vmem:[#allocation4 + $0x10] sm:$0xff] %vm391, 0.0
        %395 = vst.msk [vmem:[#allocation4 + $0x18] sm:$0xff] %vm391, 0.0
        %396 = vst.msk [vmem:[#allocation4 + $0x20] sm:$0xff] %vm391, 0.0
        %397 = vst.msk [vmem:[#allocation4 + $0x28] sm:$0xff] %vm391, 0.0
        %398 = vst.msk [vmem:[#allocation4 + $0x30] sm:$0xff] %vm391, 0.0
        %399 = vst.msk [vmem:[#allocation4 + $0x38] sm:$0xff] %vm391, 0.0
      $region44: #{tpu_custom_call.1} parent=39 // pred_fallthru
        _
      %v400 = vld [vmem:[%s331] sm:$0xf]
      %v401 = vld [vmem:[%s331 + $0x4] sm:$0xf]
      %v402 = vld [vmem:[%s331 + $0x8] sm:$0xf]
      %v403 = vld [vmem:[%s331 + $0xc] sm:$0xf]
      %v404 = vld [vmem:[%s331 + $0x10] sm:$0xf]
      %v405 = vld [vmem:[%s331 + $0x14] sm:$0xf]
      %v406 = vld [vmem:[%s331 + $0x18] sm:$0xf]
      %v407 = vld [vmem:[%s331 + $0x1c] sm:$0xf]
      %v408 = vld [vmem:[%s338] sm:$0x1]
      %v417 = vunpack.c.l.b16 %v400
      %v418 = vunpack.c.l.b16 %v401
      %v419 = vunpack.c.l.b16 %v402
      %v420 = vunpack.c.l.b16 %v403
      %v421 = vunpack.c.l.b16 %v404
      %v422 = vunpack.c.l.b16 %v405
      %v423 = vunpack.c.l.b16 %v406
      %v424 = vunpack.c.l.b16 %v407
      %v425 = vpack.c.b16 %v418, %v417
      %v426 = vpack.c.b16 %v420, %v419
      %v427 = vpack.c.b16 %v422, %v421
      %v428 = vpack.c.b16 %v424, %v423
      %vm429 = vcmask 15360
      %v431 = vsel %vm429, %v425, 0
      %v434 = vsel %vm429, %v426, 0
      %v437 = vsel %vm429, %v427, 0
      %v440 = vsel %vm429, %v428, 0
      %vm442 = vcmask 1040384
      %v444 = vsel %vm442, %v408, 0
      %446 = vmatpush.bf16.msra.mxu0 0
      %447 = vmatpush.bf16.msra.mxu0 0
      %448 = vmatpush.bf16.msra.mxu0 0
      %449 = vmatpush.bf16.msra.mxu0 0
      %450 = vmatpush.bf16.msra.mxu0 0
      %451 = vmatpush.bf16.msra.mxu0 0
      %452 = vmatpush.bf16.msra.mxu0 0
      %453 = vmatpush.bf16.msra.mxu0 %v444
      %454 = vmatmul.bf16.gmra.mxu0 %v431
      %v455 = vpop.f32.mrf.mxu0
      %v456 = vadd.f32 0.0, %v455
      %v457 = vpop.f32.mrf.mxu0
      %v458 = vadd.f32 0.0, %v457
      %459 = vmatmul.bf16.gmra.mxu0 %v434
      %v460 = vpop.f32.mrf.mxu0
      %v461 = vadd.f32 0.0, %v460
      %v462 = vpop.f32.mrf.mxu0
      %v463 = vadd.f32 0.0, %v462
      %464 = vmatmul.bf16.gmra.mxu0 %v437
      %v465 = vpop.f32.mrf.mxu0
      %v466 = vadd.f32 0.0, %v465
      %v467 = vpop.f32.mrf.mxu0
      %v468 = vadd.f32 0.0, %v467
      %469 = vmatmul.bf16.gmra.mxu0 %v440
      %v470 = vpop.f32.mrf.mxu0
      %v471 = vadd.f32 0.0, %v470
      %v472 = vpop.f32.mrf.mxu0
      %v473 = vadd.f32 0.0, %v472
      %474 = vdwg.mxu0
      %v475 = vld [vmem:[#allocation2] sm:$0xff]
      %v476 = vld [vmem:[#allocation2 + $0x8] sm:$0xff]
      %v477 = vld [vmem:[#allocation2 + $0x10] sm:$0xff]
      %v478 = vld [vmem:[#allocation2 + $0x18] sm:$0xff]
      %v479 = vld [vmem:[#allocation2 + $0x20] sm:$0xff]
      %v480 = vld [vmem:[#allocation2 + $0x28] sm:$0xff]
      %v481 = vld [vmem:[#allocation2 + $0x30] sm:$0xff]
      %v482 = vld [vmem:[#allocation2 + $0x38] sm:$0xff]
      %vm483 = vcmask 523264
      %v484 = vsel %vm483, %v456, -inf
      %485 = vmax.xlane.f32.xlu0 %v484
      %v486 = vpop.xlane.xlu0 %485
      %v487 = vsel %vm483, %v458, -inf
      %488 = vmax.xlane.f32.xlu0 %v487
      %v489 = vpop.xlane.xlu0 %488
      %v490 = vsel %vm483, %v461, -inf
      %491 = vmax.xlane.f32.xlu0 %v490
      %v492 = vpop.xlane.xlu0 %491
      %v493 = vsel %vm483, %v463, -inf
      %494 = vmax.xlane.f32.xlu0 %v493
      %v495 = vpop.xlane.xlu0 %494
      %v496 = vsel %vm483, %v466, -inf
      %497 = vmax.xlane.f32.xlu0 %v496
      %v498 = vpop.xlane.xlu0 %497
      %v499 = vsel %vm483, %v468, -inf
      %500 = vmax.xlane.f32.xlu0 %v499
      %v501 = vpop.xlane.xlu0 %500
      %v502 = vsel %vm483, %v471, -inf
      %503 = vmax.xlane.f32.xlu0 %v502
      %v504 = vpop.xlane.xlu0 %503
      %v505 = vsel %vm483, %v473, -inf
      %506 = vmax.xlane.f32.xlu0 %v505
      %v507 = vpop.xlane.xlu0 %506
      %v508 = vmax.f32 %v475, %v486
      %v509 = vmax.f32 %v476, %v489
      %v510 = vmax.f32 %v477, %v492
      %v511 = vmax.f32 %v478, %v495
      %v512 = vmax.f32 %v479, %v498
      %v513 = vmax.f32 %v480, %v501
      %v514 = vmax.f32 %v481, %v504
      %v515 = vmax.f32 %v482, %v507
      %v516 = vsub.f32 %v475, %v508
      %v517 = vsub.f32 %v476, %v509
      %v518 = vsub.f32 %v477, %v510
      %v519 = vsub.f32 %v478, %v511
      %v520 = vsub.f32 %v479, %v512
      %v521 = vsub.f32 %v480, %v513
      %v522 = vsub.f32 %v481, %v514
      %v523 = vsub.f32 %v482, %v515
      %v524 = vmul.f32 %v516, 1.442695
      %v525 = vpow.pop %v524
      %v526 = vmul.f32 %v517, 1.442695
      %v527 = vpow.pop %v526
      %v528 = vmul.f32 %v518, 1.442695
      %v529 = vpow.pop %v528
      %v530 = vmul.f32 %v519, 1.442695
      %v531 = vpow.pop %v530
      %v532 = vmul.f32 %v520, 1.442695
      %v533 = vpow.pop %v532
      %v534 = vmul.f32 %v521, 1.442695
      %v535 = vpow.pop %v534
      %v536 = vmul.f32 %v522, 1.442695
      %v537 = vpow.pop %v536
      %v538 = vmul.f32 %v523, 1.442695
      %v539 = vpow.pop %v538
      %541 = vset.pattern.permute.xlu0 0
      %542 = vperm.xlu0 %541, %v508
      %v543 = vpop.permute.xlu0 %542
      %546 = vset.pattern.permute.xlu0 0
      %547 = vperm.xlu0 %546, %v509
      %v548 = vpop.permute.xlu0 %547
      %551 = vset.pattern.permute.xlu0 0
      %552 = vperm.xlu0 %551, %v510
      %v553 = vpop.permute.xlu0 %552
      %556 = vset.pattern.permute.xlu0 0
      %557 = vperm.xlu0 %556, %v511
      %v558 = vpop.permute.xlu0 %557
      %561 = vset.pattern.permute.xlu0 0
      %562 = vperm.xlu0 %561, %v512
      %v563 = vpop.permute.xlu0 %562
      %566 = vset.pattern.permute.xlu0 0
      %567 = vperm.xlu0 %566, %v513
      %v568 = vpop.permute.xlu0 %567
      %571 = vset.pattern.permute.xlu0 0
      %572 = vperm.xlu0 %571, %v514
      %v573 = vpop.permute.xlu0 %572
      %576 = vset.pattern.permute.xlu0 0
      %577 = vperm.xlu0 %576, %v515
      %v578 = vpop.permute.xlu0 %577
      %v580 = vsub.f32 %v456, %v543
      %v581 = vsub.f32 %v458, %v548
      %v582 = vsub.f32 %v461, %v553
      %v583 = vsub.f32 %v463, %v558
      %v584 = vsub.f32 %v466, %v563
      %v585 = vsub.f32 %v468, %v568
      %v586 = vsub.f32 %v471, %v573
      %v587 = vsub.f32 %v473, %v578
      %v588 = vmul.f32 %v580, 1.442695
      %v589 = vpow.pop %v588
      %v590 = vmul.f32 %v581, 1.442695
      %v591 = vpow.pop %v590
      %v592 = vmul.f32 %v582, 1.442695
      %v593 = vpow.pop %v592
      %v594 = vmul.f32 %v583, 1.442695
      %v595 = vpow.pop %v594
      %v596 = vmul.f32 %v584, 1.442695
      %v597 = vpow.pop %v596
      %v598 = vmul.f32 %v585, 1.442695
      %v599 = vpow.pop %v598
      %v600 = vmul.f32 %v586, 1.442695
      %v601 = vpow.pop %v600
      %v602 = vmul.f32 %v587, 1.442695
      %v603 = vpow.pop %v602
      %v604 = vld [vmem:[#allocation3] sm:$0xff]
      %v605 = vld [vmem:[#allocation3 + $0x8] sm:$0xff]
      %v606 = vld [vmem:[#allocation3 + $0x10] sm:$0xff]
      %v607 = vld [vmem:[#allocation3 + $0x18] sm:$0xff]
      %v608 = vld [vmem:[#allocation3 + $0x20] sm:$0xff]
      %v609 = vld [vmem:[#allocation3 + $0x28] sm:$0xff]
      %v610 = vld [vmem:[#allocation3 + $0x30] sm:$0xff]
      %v611 = vld [vmem:[#allocation3 + $0x38] sm:$0xff]
      %v612 = vmul.f32 %v525, %v604
      %v613 = vmul.f32 %v527, %v605
      %v614 = vmul.f32 %v529, %v606
      %v615 = vmul.f32 %v531, %v607
      %v616 = vmul.f32 %v533, %v608
      %v617 = vmul.f32 %v535, %v609
      %v618 = vmul.f32 %v537, %v610
      %v619 = vmul.f32 %v539, %v611
      %v620 = vsel %vm483, %v589, 0.0
      %621 = vadd.xlane.f32.xlu0 %v620
      %v622 = vpop.xlane.xlu0 %621
      %v623 = vsel %vm483, %v591, 0.0
      %624 = vadd.xlane.f32.xlu0 %v623
      %v625 = vpop.xlane.xlu0 %624
      %v626 = vsel %vm483, %v593, 0.0
      %627 = vadd.xlane.f32.xlu0 %v626
      %v628 = vpop.xlane.xlu0 %627
      %v629 = vsel %vm483, %v595, 0.0
      %630 = vadd.xlane.f32.xlu0 %v629
      %v631 = vpop.xlane.xlu0 %630
      %v632 = vsel %vm483, %v597, 0.0
      %633 = vadd.xlane.f32.xlu0 %v632
      %v634 = vpop.xlane.xlu0 %633
      %v635 = vsel %vm483, %v599, 0.0
      %636 = vadd.xlane.f32.xlu0 %v635
      %v637 = vpop.xlane.xlu0 %636
      %v638 = vsel %vm483, %v601, 0.0
      %639 = vadd.xlane.f32.xlu0 %v638
      %v640 = vpop.xlane.xlu0 %639
      %v641 = vsel %vm483, %v603, 0.0
      %642 = vadd.xlane.f32.xlu0 %v641
      %v643 = vpop.xlane.xlu0 %642
      %v644 = vadd.f32 %v612, %v622
      %v645 = vadd.f32 %v613, %v625
      %v646 = vadd.f32 %v614, %v628
      %v647 = vadd.f32 %v615, %v631
      %v648 = vadd.f32 %v616, %v634
      %v649 = vadd.f32 %v617, %v637
      %v650 = vadd.f32 %v618, %v640
      %v651 = vadd.f32 %v619, %v643
      %vm652 = vcmask 7168
      %653 = vst.msk [vmem:[#allocation3] sm:$0xff] %vm652, %v644
      %654 = vst.msk [vmem:[#allocation3 + $0x8] sm:$0xff] %vm652, %v645
      %655 = vst.msk [vmem:[#allocation3 + $0x10] sm:$0xff] %vm652, %v646
      %656 = vst.msk [vmem:[#allocation3 + $0x18] sm:$0xff] %vm652, %v647
      %657 = vst.msk [vmem:[#allocation3 + $0x20] sm:$0xff] %vm652, %v648
      %658 = vst.msk [vmem:[#allocation3 + $0x28] sm:$0xff] %vm652, %v649
      %659 = vst.msk [vmem:[#allocation3 + $0x30] sm:$0xff] %vm652, %v650
      %660 = vst.msk [vmem:[#allocation3 + $0x38] sm:$0xff] %vm652, %v651
      %v661 = vld [vmem:[#allocation4] sm:$0xff]
      %v662 = vld [vmem:[#allocation4 + $0x8] sm:$0xff]
      %v663 = vld [vmem:[#allocation4 + $0x10] sm:$0xff]
      %v664 = vld [vmem:[#allocation4 + $0x18] sm:$0xff]
      %v665 = vld [vmem:[#allocation4 + $0x20] sm:$0xff]
      %v666 = vld [vmem:[#allocation4 + $0x28] sm:$0xff]
      %v667 = vld [vmem:[#allocation4 + $0x30] sm:$0xff]
      %v668 = vld [vmem:[#allocation4 + $0x38] sm:$0xff]
      %670 = vset.pattern.permute.xlu0 0
      %671 = vperm.xlu0 %670, %v525
      %v672 = vpop.permute.xlu0 %671
      %675 = vset.pattern.permute.xlu0 0
      %676 = vperm.xlu0 %675, %v527
      %v677 = vpop.permute.xlu0 %676
      %680 = vset.pattern.permute.xlu0 0
      %681 = vperm.xlu0 %680, %v529
      %v682 = vpop.permute.xlu0 %681
      %685 = vset.pattern.permute.xlu0 0
      %686 = vperm.xlu0 %685, %v531
      %v687 = vpop.permute.xlu0 %686
      %690 = vset.pattern.permute.xlu0 0
      %691 = vperm.xlu0 %690, %v533
      %v692 = vpop.permute.xlu0 %691
      %695 = vset.pattern.permute.xlu0 0
      %696 = vperm.xlu0 %695, %v535
      %v697 = vpop.permute.xlu0 %696
      %700 = vset.pattern.permute.xlu0 0
      %701 = vperm.xlu0 %700, %v537
      %v702 = vpop.permute.xlu0 %701
      %705 = vset.pattern.permute.xlu0 0
      %706 = vperm.xlu0 %705, %v539
      %v707 = vpop.permute.xlu0 %706
      %v709 = vmul.f32 %v672, %v661
      %v710 = vmul.f32 %v677, %v662
      %v711 = vmul.f32 %v682, %v663
      %v712 = vmul.f32 %v687, %v664
      %v713 = vmul.f32 %v692, %v665
      %v714 = vmul.f32 %v697, %v666
      %v715 = vmul.f32 %v702, %v667
      %v716 = vmul.f32 %v707, %v668
      %v717 = vpack.c.bf16 %v591, %v589
      %v718 = vpack.c.bf16 %v595, %v593
      %v719 = vpack.c.bf16 %v599, %v597
      %v720 = vpack.c.bf16 %v603, %v601
      %v721 = vld [vmem:[%s347] sm:$0xf]
      %v722 = vld [vmem:[%s347 + $0x4] sm:$0xf]
      %v723 = vld [vmem:[%s347 + $0x8] sm:$0xf]
      %v724 = vld [vmem:[%s347 + $0xc] sm:$0xf]
      %v725 = vld [vmem:[%s347 + $0x10] sm:$0xf]
      %v726 = vld [vmem:[%s347 + $0x14] sm:$0xf]
      %v727 = vld [vmem:[%s347 + $0x18] sm:$0xf]
      %v728 = vld [vmem:[%s347 + $0x1c] sm:$0xf]
      %v737 = vunpack.c.l.b16 %v721
      %v738 = vunpack.c.l.b16 %v722
      %v739 = vunpack.c.l.b16 %v723
      %v740 = vunpack.c.l.b16 %v724
      %v741 = vunpack.c.l.b16 %v725
      %v742 = vunpack.c.l.b16 %v726
      %v743 = vunpack.c.l.b16 %v727
      %v744 = vunpack.c.l.b16 %v728
      %v745 = vpack.c.b16 %v738, %v737
      %v746 = vpack.c.b16 %v740, %v739
      %v747 = vpack.c.b16 %v742, %v741
      %v748 = vpack.c.b16 %v744, %v743
      %v754 = vsel %vm483, %v717, 0
      %v757 = vsel %vm483, %v718, 0
      %v760 = vsel %vm483, %v719, 0
      %v763 = vsel %vm483, %v720, 0
      %765 = vmatpush.bf16.msra.mxu0 0
      %766 = vmatpush.bf16.msra.mxu0 0
      %767 = vmatpush.bf16.msra.mxu0 0
      %768 = vmatpush.bf16.msra.mxu0 0
      %769 = vmatpush.bf16.msra.mxu0 %v748
      %770 = vmatpush.bf16.msra.mxu0 %v747
      %771 = vmatpush.bf16.msra.mxu0 %v746
      %772 = vmatpush.bf16.msra.mxu0 %v745
      %773 = vmatmul.bf16.gmra.mxu0 %v754
      %v774 = vpop.f32.mrf.mxu0
      %v775 = vadd.f32 0.0, %v774
      %v776 = vpop.f32.mrf.mxu0
      %v777 = vadd.f32 0.0, %v776
      %778 = vmatmul.bf16.gmra.mxu0 %v757
      %v779 = vpop.f32.mrf.mxu0
      %v780 = vadd.f32 0.0, %v779
      %v781 = vpop.f32.mrf.mxu0
      %v782 = vadd.f32 0.0, %v781
      %783 = vmatmul.bf16.gmra.mxu0 %v760
      %v784 = vpop.f32.mrf.mxu0
      %v785 = vadd.f32 0.0, %v784
      %v786 = vpop.f32.mrf.mxu0
      %v787 = vadd.f32 0.0, %v786
      %788 = vmatmul.bf16.gmra.mxu0 %v763
      %v789 = vpop.f32.mrf.mxu0
      %v790 = vadd.f32 0.0, %v789
      %v791 = vpop.f32.mrf.mxu0
      %v792 = vadd.f32 0.0, %v791
      %793 = vdwg.mxu0
      %v794 = vadd.f32 %v709, %v775
      %v795 = vadd.f32 %v710, %v777
      %v796 = vadd.f32 %v711, %v780
      %v797 = vadd.f32 %v712, %v782
      %v798 = vadd.f32 %v713, %v785
      %v799 = vadd.f32 %v714, %v787
      %v800 = vadd.f32 %v715, %v790
      %v801 = vadd.f32 %v716, %v792
      %vm802 = vcmask 130048
      %803 = vst.msk [vmem:[#allocation4] sm:$0xff] %vm802, %v794
      %804 = vst.msk [vmem:[#allocation4 + $0x8] sm:$0xff] %vm802, %v795
      %805 = vst.msk [vmem:[#allocation4 + $0x10] sm:$0xff] %vm802, %v796
      %806 = vst.msk [vmem:[#allocation4 + $0x18] sm:$0xff] %vm802, %v797
      %807 = vst.msk [vmem:[#allocation4 + $0x20] sm:$0xff] %vm802, %v798
      %808 = vst.msk [vmem:[#allocation4 + $0x28] sm:$0xff] %vm802, %v799
      %809 = vst.msk [vmem:[#allocation4 + $0x30] sm:$0xff] %vm802, %v800
      %810 = vst.msk [vmem:[#allocation4 + $0x38] sm:$0xff] %vm802, %v801
      %811 = vst.msk [vmem:[#allocation2] sm:$0xff] %vm652, %v508
      %812 = vst.msk [vmem:[#allocation2 + $0x8] sm:$0xff] %vm652, %v509
      %813 = vst.msk [vmem:[#allocation2 + $0x10] sm:$0xff] %vm652, %v510
      %814 = vst.msk [vmem:[#allocation2 + $0x18] sm:$0xff] %vm652, %v511
      %815 = vst.msk [vmem:[#allocation2 + $0x20] sm:$0xff] %vm652, %v512
      %816 = vst.msk [vmem:[#allocation2 + $0x28] sm:$0xff] %vm652, %v513
      %817 = vst.msk [vmem:[#allocation2 + $0x30] sm:$0xff] %vm652, %v514
      %818 = vst.msk [vmem:[#allocation2 + $0x38] sm:$0xff] %vm652, %v515
      // Predicated region
      $region45: #{tpu_custom_call.1} parent=39 // pred_check
        %p819 = pneg %p370
      $region46: #{tpu_custom_call.1} parent=39 // pred_check_branch
        %821 = sbr.rel (%p819) target = $region48
      $region47: #{tpu_custom_call.1} parent=39 // pred_region
        %v822 = vld [vmem:[#allocation3] sm:$0xff]
        %v823 = vld [vmem:[#allocation3 + $0x8] sm:$0xff]
        %v824 = vld [vmem:[#allocation3 + $0x10] sm:$0xff]
        %v825 = vld [vmem:[#allocation3 + $0x18] sm:$0xff]
        %v826 = vld [vmem:[#allocation3 + $0x20] sm:$0xff]
        %v827 = vld [vmem:[#allocation3 + $0x28] sm:$0xff]
        %v828 = vld [vmem:[#allocation3 + $0x30] sm:$0xff]
        %v829 = vld [vmem:[#allocation3 + $0x38] sm:$0xff]
        %v830 = vrcp.pop %v822
        %v831 = vrcp.pop %v823
        %v832 = vrcp.pop %v824
        %v833 = vrcp.pop %v825
        %v834 = vrcp.pop %v826
        %v835 = vrcp.pop %v827
        %v836 = vrcp.pop %v828
        %v837 = vrcp.pop %v829
        %v838 = vld [vmem:[#allocation4] sm:$0xff]
        %v839 = vld [vmem:[#allocation4 + $0x8] sm:$0xff]
        %v840 = vld [vmem:[#allocation4 + $0x10] sm:$0xff]
        %v841 = vld [vmem:[#allocation4 + $0x18] sm:$0xff]
        %v842 = vld [vmem:[#allocation4 + $0x20] sm:$0xff]
        %v843 = vld [vmem:[#allocation4 + $0x28] sm:$0xff]
        %v844 = vld [vmem:[#allocation4 + $0x30] sm:$0xff]
        %v845 = vld [vmem:[#allocation4 + $0x38] sm:$0xff]
        %847 = vset.pattern.permute.xlu0 0
        %848 = vperm.xlu0 %847, %v830
        %v849 = vpop.permute.xlu0 %848
        %852 = vset.pattern.permute.xlu0 0
        %853 = vperm.xlu0 %852, %v831
        %v854 = vpop.permute.xlu0 %853
        %857 = vset.pattern.permute.xlu0 0
        %858 = vperm.xlu0 %857, %v832
        %v859 = vpop.permute.xlu0 %858
        %862 = vset.pattern.permute.xlu0 0
        %863 = vperm.xlu0 %862, %v833
        %v864 = vpop.permute.xlu0 %863
        %867 = vset.pattern.permute.xlu0 0
        %868 = vperm.xlu0 %867, %v834
        %v869 = vpop.permute.xlu0 %868
        %872 = vset.pattern.permute.xlu0 0
        %873 = vperm.xlu0 %872, %v835
        %v874 = vpop.permute.xlu0 %873
        %877 = vset.pattern.permute.xlu0 0
        %878 = vperm.xlu0 %877, %v836
        %v879 = vpop.permute.xlu0 %878
        %882 = vset.pattern.permute.xlu0 0
        %883 = vperm.xlu0 %882, %v837
        %v884 = vpop.permute.xlu0 %883
        %v886 = vmul.f32 %v838, %v849
        %v887 = vmul.f32 %v839, %v854
        %v888 = vmul.f32 %v840, %v859
        %v889 = vmul.f32 %v841, %v864
        %v890 = vmul.f32 %v842, %v869
        %v891 = vmul.f32 %v843, %v874
        %v892 = vmul.f32 %v844, %v879
        %v893 = vmul.f32 %v845, %v884
        %s894 = sld [smem:[#allocation5]]
        %v895 = vstv %s894
        %v896 = vmul.f32 %v895, %v886
        %v897 = vmul.f32 %v895, %v887
        %v898 = vmul.f32 %v895, %v888
        %v899 = vmul.f32 %v895, %v889
        %v900 = vmul.f32 %v895, %v890
        %v901 = vmul.f32 %v895, %v891
        %v902 = vmul.f32 %v895, %v892
        %v903 = vmul.f32 %v895, %v893
        %v904 = vld [vmem:[%s357] sm:$0xff]
        %v905 = vld [vmem:[%s357 + $0x8] sm:$0xff]
        %v906 = vld [vmem:[%s357 + $0x10] sm:$0xff]
        %v907 = vld [vmem:[%s357 + $0x18] sm:$0xff]
        %v908 = vld [vmem:[%s357 + $0x20] sm:$0xff]
        %v909 = vld [vmem:[%s357 + $0x28] sm:$0xff]
        %v910 = vld [vmem:[%s357 + $0x30] sm:$0xff]
        %v911 = vld [vmem:[%s357 + $0x38] sm:$0xff]
        %v912 = vadd.f32 %v896, %v904
        %v913 = vadd.f32 %v897, %v905
        %v914 = vadd.f32 %v898, %v906
        %v915 = vadd.f32 %v899, %v907
        %v916 = vadd.f32 %v900, %v908
        %v917 = vadd.f32 %v901, %v909
        %v918 = vadd.f32 %v902, %v910
        %v919 = vadd.f32 %v903, %v911
        %920 = vst.msk [vmem:[%s367] sm:$0xff] %vm802, %v912
        %921 = vst.msk [vmem:[%s367 + $0x8] sm:$0xff] %vm802, %v913
        %922 = vst.msk [vmem:[%s367 + $0x10] sm:$0xff] %vm802, %v914
        %923 = vst.msk [vmem:[%s367 + $0x18] sm:$0xff] %vm802, %v915
        %924 = vst.msk [vmem:[%s367 + $0x20] sm:$0xff] %vm802, %v916
        %925 = vst.msk [vmem:[%s367 + $0x28] sm:$0xff] %vm802, %v917
        %926 = vst.msk [vmem:[%s367 + $0x30] sm:$0xff] %vm802, %v918
        %927 = vst.msk [vmem:[%s367 + $0x38] sm:$0xff] %vm802, %v919
      $region48: #{tpu_custom_call.1} parent=39 // pred_fallthru
        _
      %s928 = smul.u32 8, %s23
      %p929 = scmp.lt.s32.totalorder %s22, 1
      %s930 = scalar_select %p929, %s22, 1
      %p931 = scmp.lt.s32.totalorder %s928, 7
      %s932 = scalar_select %p931, %s928, 7
      %s933 = smul.addr %s930, 8
      %s934 = sadd.s32 %s932, %s933
      %s935 = smul.addr %s934, 8
      %s936 = scalar_lea.vmem %s5, %s935
      // Predicated region
      $region49: #{tpu_custom_call.1} parent=39 // pred_check
        %p937 = pneg %p189
      $region50: #{tpu_custom_call.1} parent=39 // pred_check_branch
        %939 = sbr.rel (%p937) target = $region52
      $region51: #{tpu_custom_call.1} parent=39 // pred_region
        %s940 = smul.u32 8, %s23
      $region52: #{tpu_custom_call.1} parent=39 // pred_fallthru
        _
    $region40: #{tpu_custom_call.1} parent=5 // pred_fallthru
      _
    %p941 = scmp.le.s32.totalorder 2, %s12
    // Predicated region
    $region53: #{tpu_custom_call.1} parent=5 // pred_check
      %p942 = pneg %p941
    $region54: #{tpu_custom_call.1} parent=5 // pred_check_branch
      %944 = sbr.rel (%p942) target = $region56
    $region55: #{tpu_custom_call.1} parent=5 // pred_region
      %s945 = ssub.s32 %s12, 2
      // Predicated region
      $region57: #{tpu_custom_call.1} parent=55 // pred_check
        %p946 = pneg %p195
      $region58: #{tpu_custom_call.1} parent=55 // pred_check_branch
        %948 = sbr.rel (%p946) target = $region60
      $region59: #{tpu_custom_call.1} parent=55 // pred_region
        %s949 = smul.u32 8, %s26
        %p950 = scmp.lt.s32.totalorder %s25, 1
        %s951 = scalar_select %p950, %s25, 1
        %p952 = scmp.lt.s32.totalorder %s949, 7
        %s953 = scalar_select %p952, %s949, 7
        %s954 = smul.addr %s951, 8
        %s955 = sadd.s32 %s953, %s954
        %s956 = smul.addr %s955, 8
        %s957 = scalar_lea.vmem %s5, %s956
      $region60: #{tpu_custom_call.1} parent=55 // pred_fallthru
        _
    $region56: #{tpu_custom_call.1} parent=5 // pred_fallthru
      _
  $region6: #{tpu_custom_call.1} parent=0 // loop_footer
    %s16 = sadd.s32 1, %s12
  $region7: #{tpu_custom_call.1} parent=0 // loop_footer_branch
    %11 = sbr.rel target = $region3
  $region8: #{tpu_custom_call.1} parent=0 // loop_exit
    _

</llo_original>
